<compile_context>
chip_gen: v6e
topology: v6e:2x2x1
jax: 0.10.0
libtpu: 0.0.40
codegen_flags: <defaults>
</compile_context>

<pallas_src>
import numpy as np
import jax
import jax.numpy as jnp
from jax.experimental import pallas as pl
from jax.experimental.pallas import tpu as pltpu

# ---- model constants (from the PyTorch module) -----------------------------
DISTORTION_TYPES = ['jpeg', 'j2k', 'avc', 'hevc', 'noise', 'blur', 'other']
NUM_DIST = len(DISTORTION_TYPES)                 # 7
NUM_RANKS = 10                                   # self.num_ranks
NUM_CLASSES = NUM_RANKS * NUM_DIST               # 70
LOGIT_SCALE = float(np.exp(np.log(1.0 / 0.07)))  # CLIP logit_scale.exp()

# ---- small synthetic shapes -------------------------------------------------
B = 2                  # batch
V = 3                  # viewports per item
C, H, W = 3, 16, 16
FEAT = C * H * W       # 768 (already a 128-multiple)
EMBED = 64             # embedding dim (CLIP would be 512; kept small)

# ---- lane-dense padded sizes ------------------------------------------------
LANE = 128
D_PAD = ((EMBED + LANE - 1) // LANE) * LANE          # 128
NC_PAD = ((NUM_CLASSES + LANE - 1) // LANE) * LANE   # 128
OUT_PAD = LANE                                       # lane-dense (B, 128) store
OUT_COLS = 1 + NUM_DIST                              # 8 useful columns


def _make_iqa_kernel(b, v):
    """Kernel closed over the static batch / viewport counts."""

    def kernel(x_ref,      # VMEM (V*B, FEAT)    viewport-major flattened images
               wimg_ref,   # VMEM (FEAT, D_PAD)  stand-in encoder, cols >= EMBED zero
               tfsT_ref,   # VMEM (D_PAD, NC_PAD) logit_scale * normalized text feats, transposed
               sel_ref,    # VMEM (NC_PAD, OUT_PAD) fused [quality | distortion] selector
               out_ref,    # OUT  (B, OUT_PAD)   [:,0]=quality, [:,1:8]=distortion, rest 0
               feat_scr):  # VMEM scratch (V*B, D_PAD)
        # ---- stand-in image encoder (MXU) ----
        feat = jnp.dot(x_ref[...], wimg_ref[...],
                       preferred_element_type=jnp.float32)          # (V*B, D_PAD)

        # ---- row L2 normalize (padded zero cols contribute nothing) ----
        ss = jnp.sum(feat * feat, axis=-1, keepdims=True)
        feat_scr[...] = feat * jax.lax.rsqrt(jnp.maximum(ss, jnp.float32(1e-30)))

        # ---- viewport mean on the VPU (rows are viewport-major: row j*b+i) ----
        # Exact reassociation of the reference's post-logits mean (matmul is linear).
        fm = feat_scr[0:b, :]
        for j in range(1, v):
            fm = fm + feat_scr[j * b:(j + 1) * b, :]
        fm = fm * jnp.float32(1.0 / v)                               # (B, D_PAD)

        # ---- cosine-similarity logits (scale pre-folded, rhs pre-transposed) ----
        logits = jnp.dot(fm, tfsT_ref[...],
                         preferred_element_type=jnp.float32)        # (B, NC_PAD)

        # ---- mask lane-padded classes out of the softmax ----
        cls = jax.lax.broadcasted_iota(jnp.int32, logits.shape, 1)
        logits = jnp.where(cls < NUM_CLASSES, logits, -jnp.inf)

        # ---- stable softmax numerator; denom folded into the tail ----
        m = jnp.max(logits, axis=-1, keepdims=True)
        e = jnp.exp(logits - m)                                      # padded -> 0
        denom = jnp.sum(e, axis=-1, keepdims=True)

        # ---- fused tail matmul + single lane-dense store ----
        t = jnp.dot(e, sel_ref[...], preferred_element_type=jnp.float32)  # (B, OUT_PAD)
        out_ref[...] = t * pl.reciprocal(denom, approx=False)

    return kernel


def precompute_constants(w_img, text_feat):
    """One-time per-model constants (host-side): padded encoder weight,
    transposed scale-folded normalized text features, fused selector matrix."""
    w = np.zeros((FEAT, D_PAD), np.float32)
    w[:, :EMBED] = np.asarray(w_img, np.float32)

    tf = np.asarray(text_feat, np.float32)
    tf = tf / np.linalg.norm(tf, axis=-1, keepdims=True)
    tf = LOGIT_SCALE * tf                                  # (NUM_CLASSES, EMBED)
    tfsT = np.zeros((D_PAD, NC_PAD), np.float32)
    tfsT[:EMBED, :NUM_CLASSES] = tf.T

    # column 0: quality weight rank+1; columns 1..7: distortion one-hots
    sel = np.zeros((NC_PAD, OUT_PAD), np.float32)
    c = np.arange(NUM_CLASSES)
    sel[c, 0] = (c // NUM_DIST) + 1.0
    sel[c, 1 + (c % NUM_DIST)] = 1.0

    return jnp.asarray(w), jnp.asarray(tfsT), jnp.asarray(sel)


def mtiqa360_forward(image, w_img_pad, tfsT_pad, sel_pad):
    """image: (B, V, C, H, W) f32.  Returns (quality (B,), distortion (B, 7))."""
    b, v = image.shape[0], image.shape[1]
    # viewport-major rows: row j*b + i = (viewport j, batch item i)
    x_flat = jnp.moveaxis(image, 1, 0).reshape(v * b, -1).astype(jnp.float32)

    vmem = pl.BlockSpec(memory_space=pltpu.MemorySpace.VMEM)
    out = pl.pallas_call(
        _make_iqa_kernel(b, v),
        out_shape=jax.ShapeDtypeStruct((b, OUT_PAD), jnp.float32),
        in_specs=[vmem, vmem, vmem, vmem],
        out_specs=vmem,
        scratch_shapes=[pltpu.VMEM((v * b, D_PAD), jnp.float32)],
    )(x_flat, w_img_pad, tfsT_pad, sel_pad)

    return out[:, 0], out[:, 1:1 + NUM_DIST]


def _reference(image, w_img, text_feat):
    """Pure-JAX reference mirroring the PyTorch forward (original op order)."""
    b, v = image.shape[0], image.shape[1]
    x = image.reshape(b * v, -1).astype(jnp.float32)
    feat = x @ w_img
    feat = feat / jnp.linalg.norm(feat, axis=-1, keepdims=True)
    tf = text_feat / jnp.linalg.norm(text_feat, axis=-1, keepdims=True)
    logits = LOGIT_SCALE * feat @ tf.T
    logits = logits.reshape(b, v, -1).mean(axis=1)
    p = jax.nn.softmax(logits, axis=1)
    p = p.reshape(b, NUM_RANKS, NUM_DIST)
    level = p.sum(axis=2)
    dist = p.sum(axis=1)
    weight = jnp.arange(1, NUM_RANKS + 1, dtype=jnp.float32)[:, None]
    quality = (level @ weight)[:, 0]
    return quality, dist


if __name__ == "__main__":
    key = jax.random.PRNGKey(0)
    k_img, k_wimg, k_txt = jax.random.split(key, 3)

    image = jax.random.normal(k_img, (B, V, C, H, W), dtype=jnp.float32)
    w_img = jax.random.normal(k_wimg, (FEAT, EMBED), dtype=jnp.float32) * 0.02
    text_feat = jax.random.normal(k_txt, (NUM_CLASSES, EMBED), dtype=jnp.float32) * 0.02

    # per-model constants, computed once on the host
    w_pad, tfsT_pad, sel_pad = precompute_constants(w_img, text_feat)

    quality, distortion = jax.block_until_ready(
        mtiqa360_forward(image, w_pad, tfsT_pad, sel_pad))

    q_ref, d_ref = _reference(image, w_img, text_feat)
    assert quality.shape == (B,) and distortion.shape == (B, NUM_DIST)
    assert jnp.allclose(quality, q_ref, atol=1e-4, rtol=1e-4)
    assert jnp.allclose(distortion, d_ref, atol=1e-5, rtol=1e-4)

    print("KERNEL_OK")
</pallas_src>

<mosaic_0001>
module attributes {stable_mosaic.version = 11 : i64} {
  func.func @kernel(%arg0: memref<6x768xf32, #tpu.memory_space<vmem>>, %arg1: memref<768x128xf32, #tpu.memory_space<vmem>>, %arg2: memref<128x128xf32, #tpu.memory_space<vmem>>, %arg3: memref<128x128xf32, #tpu.memory_space<vmem>>, %arg4: memref<2x128xf32, #tpu.memory_space<vmem>>, %arg5: memref<6x128xf32, #tpu.memory_space<vmem>>) attributes {dimension_semantics = [], scalar_prefetch = 0 : i64, scratch_operands = 1 : i64, tpu.core_type = #tpu.core_type<tc>} {
    %c0 = arith.constant 0 : index
    %c0_0 = arith.constant 0 : index
    %0 = vector.load %arg0[%c0, %c0_0] : memref<6x768xf32, #tpu.memory_space<vmem>>, vector<6x768xf32>
    %c0_1 = arith.constant 0 : index
    %c0_2 = arith.constant 0 : index
    %1 = vector.load %arg1[%c0_1, %c0_2] : memref<768x128xf32, #tpu.memory_space<vmem>>, vector<768x128xf32>
    %cst = arith.constant dense<0.000000e+00> : vector<6x128xf32>
    %2 = tpu.matmul %0, %1, %cst {dimension_numbers = #tpu.dot_dimension_numbers<[1], [0], [0], [1], [0, 0, 1, 1], [], []>} : vector<6x768xf32>, vector<768x128xf32>, vector<6x128xf32> -> vector<6x128xf32>
    %3 = arith.mulf %2, %2 : vector<6x128xf32>
    %cst_3 = arith.constant dense<0.000000e+00> : vector<6xf32>
    %4 = vector.multi_reduction <add>, %3, %cst_3 [1] : vector<6x128xf32> to vector<6xf32>
    %5 = vector.shape_cast %4 : vector<6xf32> to vector<6x1xf32>
    %cst_4 = arith.constant 1.000000e-30 : f32
    %6 = vector.broadcast %cst_4 : f32 to vector<6x1xf32>
    %7 = arith.maximumf %5, %6 : vector<6x1xf32>
    %8 = math.rsqrt %7 : vector<6x1xf32>
    %9 = vector.broadcast %8 : vector<6x1xf32> to vector<6x128xf32>
    %10 = arith.mulf %2, %9 : vector<6x128xf32>
    %c0_5 = arith.constant 0 : index
    %c0_6 = arith.constant 0 : index
    %11 = vector.load %arg5[%c0_5, %c0_6] : memref<6x128xf32, #tpu.memory_space<vmem>>, vector<6x128xf32>
    tpu.vector_store %arg5[%c0_5, %c0_6], %10 {strides = array<i32>} : memref<6x128xf32, #tpu.memory_space<vmem>>, vector<6x128xf32>,
    %c0_7 = arith.constant 0 : index
    %c0_8 = arith.constant 0 : index
    %12 = vector.load %arg5[%c0_7, %c0_8] : memref<6x128xf32, #tpu.memory_space<vmem>>, vector<2x128xf32>
    %c2 = arith.constant 2 : index
    %c0_9 = arith.constant 0 : index
    %13 = vector.load %arg5[%c2, %c0_9] : memref<6x128xf32, #tpu.memory_space<vmem>>, vector<2x128xf32>
    %14 = arith.addf %12, %13 : vector<2x128xf32>
    %c4 = arith.constant 4 : index
    %c0_10 = arith.constant 0 : index
    %15 = vector.load %arg5[%c4, %c0_10] : memref<6x128xf32, #tpu.memory_space<vmem>>, vector<2x128xf32>
    %16 = arith.addf %14, %15 : vector<2x128xf32>
    %cst_11 = arith.constant 0.333333343 : f32
    %17 = vector.broadcast %cst_11 : f32 to vector<2x128xf32>
    %18 = arith.mulf %16, %17 : vector<2x128xf32>
    %c0_12 = arith.constant 0 : index
    %c0_13 = arith.constant 0 : index
    %19 = vector.load %arg2[%c0_12, %c0_13] : memref<128x128xf32, #tpu.memory_space<vmem>>, vector<128x128xf32>
    %cst_14 = arith.constant dense<0.000000e+00> : vector<2x128xf32>
    %20 = tpu.matmul %18, %19, %cst_14 {dimension_numbers = #tpu.dot_dimension_numbers<[1], [0], [0], [1], [0, 0, 1, 1], [], []>} : vector<2x128xf32>, vector<128x128xf32>, vector<2x128xf32> -> vector<2x128xf32>
    %21 = tpu.iota {dimensions = array<i32: 1>} : vector<2x128xi32>
    %c70_i32 = arith.constant 70 : i32
    %22 = vector.broadcast %c70_i32 : i32 to vector<2x128xi32>
    %23 = arith.cmpi slt, %21, %22 : vector<2x128xi32>
    %cst_15 = arith.constant 0xFF800000 : f32
    %24 = vector.broadcast %cst_15 : f32 to vector<2x128xf32>
    %25 = arith.select %23, %20, %24 : vector<2x128xi1>, vector<2x128xf32>
    %cst_16 = arith.constant dense<0xFF800000> : vector<2xf32>
    %26 = vector.multi_reduction <maximumf>, %25, %cst_16 [1] : vector<2x128xf32> to vector<2xf32>
    %27 = vector.shape_cast %26 : vector<2xf32> to vector<2x1xf32>
    %28 = vector.broadcast %27 : vector<2x1xf32> to vector<2x128xf32>
    %29 = arith.subf %25, %28 : vector<2x128xf32>
    %30 = math.exp %29 : vector<2x128xf32>
    %cst_17 = arith.constant dense<0.000000e+00> : vector<2xf32>
    %31 = vector.multi_reduction <add>, %30, %cst_17 [1] : vector<2x128xf32> to vector<2xf32>
    %32 = vector.shape_cast %31 : vector<2xf32> to vector<2x1xf32>
    %c0_18 = arith.constant 0 : index
    %c0_19 = arith.constant 0 : index
    %33 = vector.load %arg3[%c0_18, %c0_19] : memref<128x128xf32, #tpu.memory_space<vmem>>, vector<128x128xf32>
    %cst_20 = arith.constant dense<0.000000e+00> : vector<2x128xf32>
    %34 = tpu.matmul %30, %33, %cst_20 {dimension_numbers = #tpu.dot_dimension_numbers<[1], [0], [0], [1], [0, 0, 1, 1], [], []>} : vector<2x128xf32>, vector<128x128xf32>, vector<2x128xf32> -> vector<2x128xf32>
    %35 = tpu.reciprocal %32 : vector<2x1xf32> -> vector<2x1xf32>
    %36 = vector.broadcast %35 : vector<2x1xf32> to vector<2x128xf32>
    %37 = arith.mulf %34, %36 : vector<2x128xf32>
    %c0_21 = arith.constant 0 : index
    %c0_22 = arith.constant 0 : index
    %38 = vector.load %arg4[%c0_21, %c0_22] : memref<2x128xf32, #tpu.memory_space<vmem>>, vector<2x128xf32>
    tpu.vector_store %arg4[%c0_21, %c0_22], %37 {strides = array<i32>} : memref<2x128xf32, #tpu.memory_space<vmem>>, vector<2x128xf32>,
    return
  }
}

</mosaic_0001>

<llo_original>
// kernel: tpu_custom_call.1
$region0: #{tpu_custom_call.1}
  #allocation0 [shape = 'u32[]', space=smem, size = 0x4, offset = 0x4, fixed_abs, tag = 'smem constant byte address 0x4 - core index']
  #allocation1 [shape = 'u32[144,128]{1,0:T(1,128)}', space=vmem, size = 0x12000, scoped, tag = 'internal scratch']
  #allocation2 [shape = 'f32[6,128]{1,0:T(8,128)}', space=vmem, size = 0x1000, scoped, tag = 'scratch operand']
  %s0 = inlined_call_operand.hbm [shape: f32[6,768], index: 0, kind: input, shape index: {}]
  %s1 = inlined_call_operand.hbm [shape: f32[768,128], index: 1, kind: input, shape index: {}]
  %s2 = inlined_call_operand.hbm [shape: f32[128,128], index: 2, kind: input, shape index: {}]
  %s3 = inlined_call_operand.hbm [shape: f32[128,128], index: 3, kind: input, shape index: {}]
  %s4 = inlined_call_operand.hbm [shape: f32[2,128], index: 4, kind: output, shape index: {}]
  %s5 = sld [smem:[#allocation0]]
  $region42: #{tpu_custom_call.1} parent=0
    _
  %s7 = ssub.s32 1, %s5
  %s8 = scalar_select 0, %s7, %s5
  $region1: #{tpu_custom_call.1} parent=0
    #allocation3 [shape = 'u8[24576]{0}', space=vmem, size = 0x6000, scoped, tag = 'input window, operand 0, single buffered']
    #allocation4 [shape = 's32[1]{0}', space=sflag, size = 0x4, scoped, tag = 'scoped memory for tpu_custom_call.1']
    #allocation5 [shape = 's32[1]{0}', space=sflag, size = 0x4, scoped, tag = 'scoped memory for tpu_custom_call.1']
    #allocation6 [shape = 'u8[393216]{0}', space=vmem, size = 0x60000, scoped, tag = 'input window, operand 1, single buffered']
    #allocation7 [shape = 's32[1]{0}', space=sflag, size = 0x4, scoped, tag = 'scoped memory for tpu_custom_call.1']
    #allocation8 [shape = 'u8[65536]{0}', space=vmem, size = 0x10000, scoped, tag = 'input window, operand 2, single buffered']
    #allocation9 [shape = 'u8[65536]{0}', space=vmem, size = 0x10000, scoped, tag = 'input window, operand 3, single buffered']
    #allocation10 [shape = 's32[1]{0}', space=sflag, size = 0x4, scoped, tag = 'scoped memory for tpu_custom_call.1']
    #allocation11 [shape = 'u8[1024]{0}', space=vmem, size = 0x400, scoped, tag = 'output window, operand 0, single buffered']
    %9 = vsyncpa [#allocation4], 0
    %10 = vsyncpa [#allocation7], 0
    %11 = vsyncpa [#allocation10], 0
    %12 = vsyncpa [#allocation5], 0
    // Predicated region
    $region2: #{tpu_custom_call.1} parent=1 // pred_check
      _
    $region3: #{tpu_custom_call.1} parent=1 // pred_check_branch
      %14 = sbr.rel (0) target = $region5
    $region4: #{tpu_custom_call.1} parent=1 // pred_region
      %s16 = ssub.s32 768, 768
      %17 = vsyncadd [#allocation4], %s16
      %s19 = sshll.u32 [#allocation3], 4
      %s20 = int_to_ptr.vmem [resolvable:$true] %s19
      %22 = dma.hbm_to_vmem [thread:$0]  %s0, 768, %s20, [#allocation4]
    $region5: #{tpu_custom_call.1} parent=1 // pred_fallthru
      _
    // Predicated region
    $region6: #{tpu_custom_call.1} parent=1 // pred_check
      _
    $region7: #{tpu_custom_call.1} parent=1 // pred_check_branch
      %24 = sbr.rel (0) target = $region9
    $region8: #{tpu_custom_call.1} parent=1 // pred_region
      %s26 = ssub.s32 12288, 12288
      %27 = vsyncadd [#allocation7], %s26
      %s28 = sshll.u32 [#allocation6], 4
      %s29 = int_to_ptr.vmem [resolvable:$true] %s28
      %34 = dma.hbm_to_vmem [thread:$0]  %s1, 12288, %s29, [#allocation7], 128, 128, 8
    $region9: #{tpu_custom_call.1} parent=1 // pred_fallthru
      _
    // Predicated region
    $region10: #{tpu_custom_call.1} parent=1 // pred_check
      _
    $region11: #{tpu_custom_call.1} parent=1 // pred_check_branch
      %36 = sbr.rel (0) target = $region13
    $region12: #{tpu_custom_call.1} parent=1 // pred_region
      %s38 = ssub.s32 2048, 2048
      %39 = vsyncadd [#allocation7], %s38
      %s40 = sshll.u32 [#allocation8], 4
      %s41 = int_to_ptr.vmem [resolvable:$true] %s40
      %46 = dma.hbm_to_vmem [thread:$0]  %s2, 2048, %s41, [#allocation7], 128, 128, 8
    $region13: #{tpu_custom_call.1} parent=1 // pred_fallthru
      _
    // Predicated region
    $region14: #{tpu_custom_call.1} parent=1 // pred_check
      _
    $region15: #{tpu_custom_call.1} parent=1 // pred_check_branch
      %48 = sbr.rel (0) target = $region17
    $region16: #{tpu_custom_call.1} parent=1 // pred_region
      %s50 = ssub.s32 2048, 2048
      %51 = vsyncadd [#allocation10], %s50
      %s52 = sshll.u32 [#allocation9], 4
      %s53 = int_to_ptr.vmem [resolvable:$true] %s52
      %58 = dma.hbm_to_vmem [thread:$0]  %s3, 2048, %s53, [#allocation10], 128, 128, 8
    $region17: #{tpu_custom_call.1} parent=1 // pred_fallthru
      _
    // Predicated region
    $region18: #{tpu_custom_call.1} parent=1 // pred_check
      _
    $region19: #{tpu_custom_call.1} parent=1 // pred_check_branch
      %60 = sbr.rel (0) target = $region21
    $region20: #{tpu_custom_call.1} parent=1 // pred_region
      %61 = dma.done [#allocation4], 768
    $region21: #{tpu_custom_call.1} parent=1 // pred_fallthru
      _
    // Predicated region
    $region22: #{tpu_custom_call.1} parent=1 // pred_check
      _
    $region23: #{tpu_custom_call.1} parent=1 // pred_check_branch
      %63 = sbr.rel (0) target = $region25
    $region24: #{tpu_custom_call.1} parent=1 // pred_region
      %64 = dma.done [#allocation7], 12288
    $region25: #{tpu_custom_call.1} parent=1 // pred_fallthru
      _
    // Predicated region
    $region26: #{tpu_custom_call.1} parent=1 // pred_check
      _
    $region27: #{tpu_custom_call.1} parent=1 // pred_check_branch
      %66 = sbr.rel (0) target = $region29
    $region28: #{tpu_custom_call.1} parent=1 // pred_region
      %67 = dma.done [#allocation7], 2048
    $region29: #{tpu_custom_call.1} parent=1 // pred_fallthru
      _
    // Predicated region
    $region30: #{tpu_custom_call.1} parent=1 // pred_check
      _
    $region31: #{tpu_custom_call.1} parent=1 // pred_check_branch
      %69 = sbr.rel (0) target = $region33
    $region32: #{tpu_custom_call.1} parent=1 // pred_region
      %70 = dma.done [#allocation10], 2048
    $region33: #{tpu_custom_call.1} parent=1 // pred_fallthru
      _
    %v71 = vld [vmem:[#allocation3] sm:$0x3f]
    %v72 = vld [vmem:[#allocation3 + $0x8] sm:$0x3f]
    %v73 = vld [vmem:[#allocation3 + $0x10] sm:$0x3f]
    %v74 = vld [vmem:[#allocation3 + $0x18] sm:$0x3f]
    %v75 = vld [vmem:[#allocation3 + $0x20] sm:$0x3f]
    %v76 = vld [vmem:[#allocation3 + $0x28] sm:$0x3f]
    %v77 = vld [vmem:[#allocation6] sm:$0xff]
    %v78 = vld [vmem:[#allocation6 + $0x8] sm:$0xff]
    %v79 = vld [vmem:[#allocation6 + $0x10] sm:$0xff]
    %v80 = vld [vmem:[#allocation6 + $0x18] sm:$0xff]
    %v81 = vld [vmem:[#allocation6 + $0x20] sm:$0xff]
    %v82 = vld [vmem:[#allocation6 + $0x28] sm:$0xff]
    %v83 = vld [vmem:[#allocation6 + $0x30] sm:$0xff]
    %v84 = vld [vmem:[#allocation6 + $0x38] sm:$0xff]
    %v85 = vld [vmem:[#allocation6 + $0x40] sm:$0xff]
    %v86 = vld [vmem:[#allocation6 + $0x48] sm:$0xff]
    %v87 = vld [vmem:[#allocation6 + $0x50] sm:$0xff]
    %v88 = vld [vmem:[#allocation6 + $0x58] sm:$0xff]
    %v89 = vld [vmem:[#allocation6 + $0x60] sm:$0xff]
    %v90 = vld [vmem:[#allocation6 + $0x68] sm:$0xff]
    %v91 = vld [vmem:[#allocation6 + $0x70] sm:$0xff]
    %v92 = vld [vmem:[#allocation6 + $0x78] sm:$0xff]
    %v93 = vld [vmem:[#allocation6 + $0x80] sm:$0xff]
    %v94 = vld [vmem:[#allocation6 + $0x88] sm:$0xff]
    %v95 = vld [vmem:[#allocation6 + $0x90] sm:$0xff]
    %v96 = vld [vmem:[#allocation6 + $0x98] sm:$0xff]
    %v97 = vld [vmem:[#allocation6 + $0xa0] sm:$0xff]
    %v98 = vld [vmem:[#allocation6 + $0xa8] sm:$0xff]
    %v99 = vld [vmem:[#allocation6 + $0xb0] sm:$0xff]
    %v100 = vld [vmem:[#allocation6 + $0xb8] sm:$0xff]
    %v101 = vld [vmem:[#allocation6 + $0xc0] sm:$0xff]
    %v102 = vld [vmem:[#allocation6 + $0xc8] sm:$0xff]
    %v103 = vld [vmem:[#allocation6 + $0xd0] sm:$0xff]
    %v104 = vld [vmem:[#allocation6 + $0xd8] sm:$0xff]
    %v105 = vld [vmem:[#allocation6 + $0xe0] sm:$0xff]
    %v106 = vld [vmem:[#allocation6 + $0xe8] sm:$0xff]
    %v107 = vld [vmem:[#allocation6 + $0xf0] sm:$0xff]
    %v108 = vld [vmem:[#allocation6 + $0xf8] sm:$0xff]
    %v109 = vld [vmem:[#allocation6 + $0x100] sm:$0xff]
    %v110 = vld [vmem:[#allocation6 + $0x108] sm:$0xff]
    %v111 = vld [vmem:[#allocation6 + $0x110] sm:$0xff]
    %v112 = vld [vmem:[#allocation6 + $0x118] sm:$0xff]
    %v113 = vld [vmem:[#allocation6 + $0x120] sm:$0xff]
    %v114 = vld [vmem:[#allocation6 + $0x128] sm:$0xff]
    %v115 = vld [vmem:[#allocation6 + $0x130] sm:$0xff]
    %v116 = vld [vmem:[#allocation6 + $0x138] sm:$0xff]
    %v117 = vld [vmem:[#allocation6 + $0x140] sm:$0xff]
    %v118 = vld [vmem:[#allocation6 + $0x148] sm:$0xff]
    %v119 = vld [vmem:[#allocation6 + $0x150] sm:$0xff]
    %v120 = vld [vmem:[#allocation6 + $0x158] sm:$0xff]
    %v121 = vld [vmem:[#allocation6 + $0x160] sm:$0xff]
    %v122 = vld [vmem:[#allocation6 + $0x168] sm:$0xff]
    %v123 = vld [vmem:[#allocation6 + $0x170] sm:$0xff]
    %v124 = vld [vmem:[#allocation6 + $0x178] sm:$0xff]
    %v125 = vld [vmem:[#allocation6 + $0x180] sm:$0xff]
    %v126 = vld [vmem:[#allocation6 + $0x188] sm:$0xff]
    %v127 = vld [vmem:[#allocation6 + $0x190] sm:$0xff]
    %v128 = vld [vmem:[#allocation6 + $0x198] sm:$0xff]
    %v129 = vld [vmem:[#allocation6 + $0x1a0] sm:$0xff]
    %v130 = vld [vmem:[#allocation6 + $0x1a8] sm:$0xff]
    %v131 = vld [vmem:[#allocation6 + $0x1b0] sm:$0xff]
    %v132 = vld [vmem:[#allocation6 + $0x1b8] sm:$0xff]
    %v133 = vld [vmem:[#allocation6 + $0x1c0] sm:$0xff]
    %v134 = vld [vmem:[#allocation6 + $0x1c8] sm:$0xff]
    %v135 = vld [vmem:[#allocation6 + $0x1d0] sm:$0xff]
    %v136 = vld [vmem:[#allocation6 + $0x1d8] sm:$0xff]
    %v137 = vld [vmem:[#allocation6 + $0x1e0] sm:$0xff]
    %v138 = vld [vmem:[#allocation6 + $0x1e8] sm:$0xff]
    %v139 = vld [vmem:[#allocation6 + $0x1f0] sm:$0xff]
    %v140 = vld [vmem:[#allocation6 + $0x1f8] sm:$0xff]
    %v141 = vld [vmem:[#allocation6 + $0x200] sm:$0xff]
    %v142 = vld [vmem:[#allocation6 + $0x208] sm:$0xff]
    %v143 = vld [vmem:[#allocation6 + $0x210] sm:$0xff]
    %v144 = vld [vmem:[#allocation6 + $0x218] sm:$0xff]
    %v145 = vld [vmem:[#allocation6 + $0x220] sm:$0xff]
    %v146 = vld [vmem:[#allocation6 + $0x228] sm:$0xff]
    %v147 = vld [vmem:[#allocation6 + $0x230] sm:$0xff]
    %v148 = vld [vmem:[#allocation6 + $0x238] sm:$0xff]
    %v149 = vld [vmem:[#allocation6 + $0x240] sm:$0xff]
    %v150 = vld [vmem:[#allocation6 + $0x248] sm:$0xff]
    %v151 = vld [vmem:[#allocation6 + $0x250] sm:$0xff]
    %v152 = vld [vmem:[#allocation6 + $0x258] sm:$0xff]
    %v153 = vld [vmem:[#allocation6 + $0x260] sm:$0xff]
    %v154 = vld [vmem:[#allocation6 + $0x268] sm:$0xff]
    %v155 = vld [vmem:[#allocation6 + $0x270] sm:$0xff]
    %v156 = vld [vmem:[#allocation6 + $0x278] sm:$0xff]
    %v157 = vld [vmem:[#allocation6 + $0x280] sm:$0xff]
    %v158 = vld [vmem:[#allocation6 + $0x288] sm:$0xff]
    %v159 = vld [vmem:[#allocation6 + $0x290] sm:$0xff]
    %v160 = vld [vmem:[#allocation6 + $0x298] sm:$0xff]
    %v161 = vld [vmem:[#allocation6 + $0x2a0] sm:$0xff]
    %v162 = vld [vmem:[#allocation6 + $0x2a8] sm:$0xff]
    %v163 = vld [vmem:[#allocation6 + $0x2b0] sm:$0xff]
    %v164 = vld [vmem:[#allocation6 + $0x2b8] sm:$0xff]
    %v165 = vld [vmem:[#allocation6 + $0x2c0] sm:$0xff]
    %v166 = vld [vmem:[#allocation6 + $0x2c8] sm:$0xff]
    %v167 = vld [vmem:[#allocation6 + $0x2d0] sm:$0xff]
    %v168 = vld [vmem:[#allocation6 + $0x2d8] sm:$0xff]
    %v169 = vld [vmem:[#allocation6 + $0x2e0] sm:$0xff]
    %v170 = vld [vmem:[#allocation6 + $0x2e8] sm:$0xff]
    %v171 = vld [vmem:[#allocation6 + $0x2f0] sm:$0xff]
    %v172 = vld [vmem:[#allocation6 + $0x2f8] sm:$0xff]
    %173 = vmatprep.subr.mxu0 0.0
    %174 = vmatpush1.msra.mxu0 %v92
    %175 = vmatprep.subr.mxu0 0.0
    %176 = vmatpush1.msra.mxu0 %v91
    %177 = vmatprep.subr.mxu0 0.0
    %178 = vmatpush1.msra.mxu0 %v90
    %179 = vmatprep.subr.mxu0 0.0
    %180 = vmatpush1.msra.mxu0 %v89
    %181 = vmatprep.subr.mxu0 0.0
    %182 = vmatpush1.msra.mxu0 %v88
    %183 = vmatprep.subr.mxu0 0.0
    %184 = vmatpush1.msra.mxu0 %v87
    %185 = vmatprep.subr.mxu0 0.0
    %186 = vmatpush1.msra.mxu0 %v86
    %187 = vmatprep.subr.mxu0 0.0
    %188 = vmatpush1.msra.mxu0 %v85
    %189 = vmatprep.subr.mxu0 0.0
    %190 = vmatpush1.msra.mxu0 %v84
    %191 = vmatprep.subr.mxu0 0.0
    %192 = vmatpush1.msra.mxu0 %v83
    %193 = vmatprep.subr.mxu0 0.0
    %194 = vmatpush1.msra.mxu0 %v82
    %195 = vmatprep.subr.mxu0 0.0
    %196 = vmatpush1.msra.mxu0 %v81
    %197 = vmatprep.subr.mxu0 0.0
    %198 = vmatpush1.msra.mxu0 %v80
    %199 = vmatprep.subr.mxu0 0.0
    %200 = vmatpush1.msra.mxu0 %v79
    %201 = vmatprep.subr.mxu0 0.0
    %202 = vmatpush1.msra.mxu0 %v78
    %203 = vmatprep.subr.mxu0 0.0
    %204 = vmatpush1.msra.mxu0 %v77
    %205 = vmatprep.subr.mxu0 0.0
    %206 = vmatpush2.msra.mxu0 %v108
    %207 = vmatprep.subr.mxu0 0.0
    %208 = vmatpush2.msra.mxu0 %v107
    %209 = vmatprep.subr.mxu0 0.0
    %210 = vmatpush2.msra.mxu0 %v106
    %211 = vmatprep.subr.mxu0 0.0
    %212 = vmatpush2.msra.mxu0 %v105
    %213 = vmatprep.subr.mxu0 0.0
    %214 = vmatpush2.msra.mxu0 %v104
    %215 = vmatprep.subr.mxu0 0.0
    %216 = vmatpush2.msra.mxu0 %v103
    %217 = vmatprep.subr.mxu0 0.0
    %218 = vmatpush2.msra.mxu0 %v102
    %219 = vmatprep.subr.mxu0 0.0
    %220 = vmatpush2.msra.mxu0 %v101
    %221 = vmatprep.subr.mxu0 0.0
    %222 = vmatpush2.msra.mxu0 %v100
    %223 = vmatprep.subr.mxu0 0.0
    %224 = vmatpush2.msra.mxu0 %v99
    %225 = vmatprep.subr.mxu0 0.0
    %226 = vmatpush2.msra.mxu0 %v98
    %227 = vmatprep.subr.mxu0 0.0
    %228 = vmatpush2.msra.mxu0 %v97
    %229 = vmatprep.subr.mxu0 0.0
    %230 = vmatpush2.msra.mxu0 %v96
    %231 = vmatprep.subr.mxu0 0.0
    %232 = vmatpush2.msra.mxu0 %v95
    %233 = vmatprep.subr.mxu0 0.0
    %234 = vmatpush2.msra.mxu0 %v94
    %235 = vmatprep.subr.mxu0 0.0
    %236 = vmatpush2.msra.mxu0 %v93
    %237 = vmatprep.mubr.f32.mxu0 %v72
    %238 = vmatmul.mubr.f32.gmra.mxu0 %v71
    %v239 = vpop.f32.mrf.mxu0
    %v240 = vadd.f32 0.0, %v239
    %v241 = vpop.f32.mrf.mxu0
    %242 = vdwg.mxu0
    %243 = vmatprep.subr.mxu0 0.0
    %244 = vmatpush1.msra.mxu0 %v124
    %245 = vmatprep.subr.mxu0 0.0
    %246 = vmatpush1.msra.mxu0 %v123
    %247 = vmatprep.subr.mxu0 0.0
    %248 = vmatpush1.msra.mxu0 %v122
    %249 = vmatprep.subr.mxu0 0.0
    %250 = vmatpush1.msra.mxu0 %v121
    %251 = vmatprep.subr.mxu0 0.0
    %252 = vmatpush1.msra.mxu0 %v120
    %253 = vmatprep.subr.mxu0 0.0
    %254 = vmatpush1.msra.mxu0 %v119
    %255 = vmatprep.subr.mxu0 0.0
    %256 = vmatpush1.msra.mxu0 %v118
    %257 = vmatprep.subr.mxu0 0.0
    %258 = vmatpush1.msra.mxu0 %v117
    %259 = vmatprep.subr.mxu0 0.0
    %260 = vmatpush1.msra.mxu0 %v116
    %261 = vmatprep.subr.mxu0 0.0
    %262 = vmatpush1.msra.mxu0 %v115
    %263 = vmatprep.subr.mxu0 0.0
    %264 = vmatpush1.msra.mxu0 %v114
    %265 = vmatprep.subr.mxu0 0.0
    %266 = vmatpush1.msra.mxu0 %v113
    %267 = vmatprep.subr.mxu0 0.0
    %268 = vmatpush1.msra.mxu0 %v112
    %269 = vmatprep.subr.mxu0 0.0
    %270 = vmatpush1.msra.mxu0 %v111
    %271 = vmatprep.subr.mxu0 0.0
    %272 = vmatpush1.msra.mxu0 %v110
    %273 = vmatprep.subr.mxu0 0.0
    %274 = vmatpush1.msra.mxu0 %v109
    %275 = vmatprep.subr.mxu0 0.0
    %276 = vmatpush2.msra.mxu0 %v140
    %277 = vmatprep.subr.mxu0 0.0
    %278 = vmatpush2.msra.mxu0 %v139
    %279 = vmatprep.subr.mxu0 0.0
    %280 = vmatpush2.msra.mxu0 %v138
    %281 = vmatprep.subr.mxu0 0.0
    %282 = vmatpush2.msra.mxu0 %v137
    %283 = vmatprep.subr.mxu0 0.0
    %284 = vmatpush2.msra.mxu0 %v136
    %285 = vmatprep.subr.mxu0 0.0
    %286 = vmatpush2.msra.mxu0 %v135
    %287 = vmatprep.subr.mxu0 0.0
    %288 = vmatpush2.msra.mxu0 %v134
    %289 = vmatprep.subr.mxu0 0.0
    %290 = vmatpush2.msra.mxu0 %v133
    %291 = vmatprep.subr.mxu0 0.0
    %292 = vmatpush2.msra.mxu0 %v132
    %293 = vmatprep.subr.mxu0 0.0
    %294 = vmatpush2.msra.mxu0 %v131
    %295 = vmatprep.subr.mxu0 0.0
    %296 = vmatpush2.msra.mxu0 %v130
    %297 = vmatprep.subr.mxu0 0.0
    %298 = vmatpush2.msra.mxu0 %v129
    %299 = vmatprep.subr.mxu0 0.0
    %300 = vmatpush2.msra.mxu0 %v128
    %301 = vmatprep.subr.mxu0 0.0
    %302 = vmatpush2.msra.mxu0 %v127
    %303 = vmatprep.subr.mxu0 0.0
    %304 = vmatpush2.msra.mxu0 %v126
    %305 = vmatprep.subr.mxu0 0.0
    %306 = vmatpush2.msra.mxu0 %v125
    %307 = vmatprep.mubr.f32.mxu0 %v74
    %308 = vmatmul.mubr.f32.gmra.mxu0 %v73
    %v309 = vpop.f32.mrf.mxu0
    %v310 = vadd.f32 %v240, %v309
    %v311 = vpop.f32.mrf.mxu0
    %312 = vdwg.mxu0
    %313 = vmatprep.subr.mxu0 0.0
    %314 = vmatpush1.msra.mxu0 %v156
    %315 = vmatprep.subr.mxu0 0.0
    %316 = vmatpush1.msra.mxu0 %v155
    %317 = vmatprep.subr.mxu0 0.0
    %318 = vmatpush1.msra.mxu0 %v154
    %319 = vmatprep.subr.mxu0 0.0
    %320 = vmatpush1.msra.mxu0 %v153
    %321 = vmatprep.subr.mxu0 0.0
    %322 = vmatpush1.msra.mxu0 %v152
    %323 = vmatprep.subr.mxu0 0.0
    %324 = vmatpush1.msra.mxu0 %v151
    %325 = vmatprep.subr.mxu0 0.0
    %326 = vmatpush1.msra.mxu0 %v150
    %327 = vmatprep.subr.mxu0 0.0
    %328 = vmatpush1.msra.mxu0 %v149
    %329 = vmatprep.subr.mxu0 0.0
    %330 = vmatpush1.msra.mxu0 %v148
    %331 = vmatprep.subr.mxu0 0.0
    %332 = vmatpush1.msra.mxu0 %v147
    %333 = vmatprep.subr.mxu0 0.0
    %334 = vmatpush1.msra.mxu0 %v146
    %335 = vmatprep.subr.mxu0 0.0
    %336 = vmatpush1.msra.mxu0 %v145
    %337 = vmatprep.subr.mxu0 0.0
    %338 = vmatpush1.msra.mxu0 %v144
    %339 = vmatprep.subr.mxu0 0.0
    %340 = vmatpush1.msra.mxu0 %v143
    %341 = vmatprep.subr.mxu0 0.0
    %342 = vmatpush1.msra.mxu0 %v142
    %343 = vmatprep.subr.mxu0 0.0
    %344 = vmatpush1.msra.mxu0 %v141
    %345 = vmatprep.subr.mxu0 0.0
    %346 = vmatpush2.msra.mxu0 %v172
    %347 = vmatprep.subr.mxu0 0.0
    %348 = vmatpush2.msra.mxu0 %v171
    %349 = vmatprep.subr.mxu0 0.0
    %350 = vmatpush2.msra.mxu0 %v170
    %351 = vmatprep.subr.mxu0 0.0
    %352 = vmatpush2.msra.mxu0 %v169
    %353 = vmatprep.subr.mxu0 0.0
    %354 = vmatpush2.msra.mxu0 %v168
    %355 = vmatprep.subr.mxu0 0.0
    %356 = vmatpush2.msra.mxu0 %v167
    %357 = vmatprep.subr.mxu0 0.0
    %358 = vmatpush2.msra.mxu0 %v166
    %359 = vmatprep.subr.mxu0 0.0
    %360 = vmatpush2.msra.mxu0 %v165
    %361 = vmatprep.subr.mxu0 0.0
    %362 = vmatpush2.msra.mxu0 %v164
    %363 = vmatprep.subr.mxu0 0.0
    %364 = vmatpush2.msra.mxu0 %v163
    %365 = vmatprep.subr.mxu0 0.0
    %366 = vmatpush2.msra.mxu0 %v162
    %367 = vmatprep.subr.mxu0 0.0
    %368 = vmatpush2.msra.mxu0 %v161
    %369 = vmatprep.subr.mxu0 0.0
    %370 = vmatpush2.msra.mxu0 %v160
    %371 = vmatprep.subr.mxu0 0.0
    %372 = vmatpush2.msra.mxu0 %v159
    %373 = vmatprep.subr.mxu0 0.0
    %374 = vmatpush2.msra.mxu0 %v158
    %375 = vmatprep.subr.mxu0 0.0
    %376 = vmatpush2.msra.mxu0 %v157
    %377 = vmatprep.mubr.f32.mxu0 %v76
    %378 = vmatmul.mubr.f32.gmra.mxu0 %v75
    %v379 = vpop.f32.mrf.mxu0
    %v380 = vadd.f32 %v310, %v379
    %v381 = vpop.f32.mrf.mxu0
    %382 = vdwg.mxu0
    %v383 = vmul.f32 %v380, %v380
    %vm384 = vcmask 1045504
    %v385 = vsel %vm384, %v383, 0.0
    %386 = vadd.xlane.f32.xlu0 %v385
    %v387 = vpop.xlane.xlu0 %386
    %v388 = vmax.f32 %v387, 1e-30
    %v389 = vrsqrt.pop %v388
    %v390 = vmul.f32 %v380, %v389
    %391 = vst [vmem:[#allocation2] sm:$0x3f] %v390
    %v392 = vld [vmem:[#allocation2] sm:$0x3]
    %v393 = vld [vmem:[#allocation2 + $0x2] sm:$0x3]
    %v394 = vadd.f32 %v392, %v393
    %v395 = vld [vmem:[#allocation2 + $0x4] sm:$0x3]
    %v396 = vadd.f32 %v394, %v395
    %v397 = vmul.f32 %v396, 0.33333334
    %v398 = vld [vmem:[#allocation8] sm:$0xff]
    %v399 = vld [vmem:[#allocation8 + $0x8] sm:$0xff]
    %v400 = vld [vmem:[#allocation8 + $0x10] sm:$0xff]
    %v401 = vld [vmem:[#allocation8 + $0x18] sm:$0xff]
    %v402 = vld [vmem:[#allocation8 + $0x20] sm:$0xff]
    %v403 = vld [vmem:[#allocation8 + $0x28] sm:$0xff]
    %v404 = vld [vmem:[#allocation8 + $0x30] sm:$0xff]
    %v405 = vld [vmem:[#allocation8 + $0x38] sm:$0xff]
    %v406 = vld [vmem:[#allocation8 + $0x40] sm:$0xff]
    %v407 = vld [vmem:[#allocation8 + $0x48] sm:$0xff]
    %v408 = vld [vmem:[#allocation8 + $0x50] sm:$0xff]
    %v409 = vld [vmem:[#allocation8 + $0x58] sm:$0xff]
    %v410 = vld [vmem:[#allocation8 + $0x60] sm:$0xff]
    %v411 = vld [vmem:[#allocation8 + $0x68] sm:$0xff]
    %v412 = vld [vmem:[#allocation8 + $0x70] sm:$0xff]
    %v413 = vld [vmem:[#allocation8 + $0x78] sm:$0xff]
    %414 = vmatprep.subr.mxu0 0.0
    %415 = vmatpush1.msra.mxu0 %v413
    %416 = vmatprep.subr.mxu0 0.0
    %417 = vmatpush1.msra.mxu0 %v412
    %418 = vmatprep.subr.mxu0 0.0
    %419 = vmatpush1.msra.mxu0 %v411
    %420 = vmatprep.subr.mxu0 0.0
    %421 = vmatpush1.msra.mxu0 %v410
    %422 = vmatprep.subr.mxu0 0.0
    %423 = vmatpush1.msra.mxu0 %v409
    %424 = vmatprep.subr.mxu0 0.0
    %425 = vmatpush1.msra.mxu0 %v408
    %426 = vmatprep.subr.mxu0 0.0
    %427 = vmatpush1.msra.mxu0 %v407
    %428 = vmatprep.subr.mxu0 0.0
    %429 = vmatpush1.msra.mxu0 %v406
    %430 = vmatprep.subr.mxu0 0.0
    %431 = vmatpush1.msra.mxu0 %v405
    %432 = vmatprep.subr.mxu0 0.0
    %433 = vmatpush1.msra.mxu0 %v404
    %434 = vmatprep.subr.mxu0 0.0
    %435 = vmatpush1.msra.mxu0 %v403
    %436 = vmatprep.subr.mxu0 0.0
    %437 = vmatpush1.msra.mxu0 %v402
    %438 = vmatprep.subr.mxu0 0.0
    %439 = vmatpush1.msra.mxu0 %v401
    %440 = vmatprep.subr.mxu0 0.0
    %441 = vmatpush1.msra.mxu0 %v400
    %442 = vmatprep.subr.mxu0 0.0
    %443 = vmatpush1.msra.mxu0 %v399
    %444 = vmatprep.subr.mxu0 0.0
    %445 = vmatpush1.msra.mxu0 %v398
    %446 = vmatprep.subr.mxu0 0.0
    %447 = vmatpush2.msra.mxu0 0.0
    %448 = vmatprep.subr.mxu0 0.0
    %449 = vmatpush2.msra.mxu0 0.0
    %450 = vmatprep.subr.mxu0 0.0
    %451 = vmatpush2.msra.mxu0 0.0
    %452 = vmatprep.subr.mxu0 0.0
    %453 = vmatpush2.msra.mxu0 0.0
    %454 = vmatprep.subr.mxu0 0.0
    %455 = vmatpush2.msra.mxu0 0.0
    %456 = vmatprep.subr.mxu0 0.0
    %457 = vmatpush2.msra.mxu0 0.0
    %458 = vmatprep.subr.mxu0 0.0
    %459 = vmatpush2.msra.mxu0 0.0
    %460 = vmatprep.subr.mxu0 0.0
    %461 = vmatpush2.msra.mxu0 0.0
    %462 = vmatprep.subr.mxu0 0.0
    %463 = vmatpush2.msra.mxu0 0.0
    %464 = vmatprep.subr.mxu0 0.0
    %465 = vmatpush2.msra.mxu0 0.0
    %466 = vmatprep.subr.mxu0 0.0
    %467 = vmatpush2.msra.mxu0 0.0
    %468 = vmatprep.subr.mxu0 0.0
    %469 = vmatpush2.msra.mxu0 0.0
    %470 = vmatprep.subr.mxu0 0.0
    %471 = vmatpush2.msra.mxu0 0.0
    %472 = vmatprep.subr.mxu0 0.0
    %473 = vmatpush2.msra.mxu0 0.0
    %474 = vmatprep.subr.mxu0 0.0
    %475 = vmatpush2.msra.mxu0 0.0
    %476 = vmatprep.subr.mxu0 0.0
    %477 = vmatpush2.msra.mxu0 0.0
    %478 = vmatprep.mubr.f32.mxu0 0.0
    %479 = vmatmul.mubr.f32.gmra.mxu0 %v397
    %v480 = vpop.f32.mrf.mxu0
    %v481 = vadd.f32 0.0, %v480
    %v482 = vpop.f32.mrf.mxu0
    %483 = vdwg.mxu0
    %v484 = vlaneseq
    %v485 = vand.u32 %v484, 127
    %vm486 = vcmp.lt.s32.totalorder %v485, 70
    %v487 = vsel %vm486, %v481, -inf
    %vm488 = vcmask 1041408
    %v489 = vsel %vm488, %v487, -inf
    %490 = vmax.xlane.f32.xlu0 %v489
    %v491 = vpop.xlane.xlu0 %490
    %v492 = vsub.f32 %v487, %v491
    %v493 = vmul.f32 %v492, 1.442695
    %v494 = vpow.pop %v493
    %v495 = vsel %vm488, %v494, 0.0
    %496 = vadd.xlane.f32.xlu0 %v495
    %v497 = vpop.xlane.xlu0 %496
    %v498 = vld [vmem:[#allocation9] sm:$0xff]
    %v499 = vld [vmem:[#allocation9 + $0x8] sm:$0xff]
    %v500 = vld [vmem:[#allocation9 + $0x10] sm:$0xff]
    %v501 = vld [vmem:[#allocation9 + $0x18] sm:$0xff]
    %v502 = vld [vmem:[#allocation9 + $0x20] sm:$0xff]
    %v503 = vld [vmem:[#allocation9 + $0x28] sm:$0xff]
    %v504 = vld [vmem:[#allocation9 + $0x30] sm:$0xff]
    %v505 = vld [vmem:[#allocation9 + $0x38] sm:$0xff]
    %v506 = vld [vmem:[#allocation9 + $0x40] sm:$0xff]
    %v507 = vld [vmem:[#allocation9 + $0x48] sm:$0xff]
    %v508 = vld [vmem:[#allocation9 + $0x50] sm:$0xff]
    %v509 = vld [vmem:[#allocation9 + $0x58] sm:$0xff]
    %v510 = vld [vmem:[#allocation9 + $0x60] sm:$0xff]
    %v511 = vld [vmem:[#allocation9 + $0x68] sm:$0xff]
    %v512 = vld [vmem:[#allocation9 + $0x70] sm:$0xff]
    %v513 = vld [vmem:[#allocation9 + $0x78] sm:$0xff]
    %514 = vmatprep.subr.mxu0 0.0
    %515 = vmatpush1.msra.mxu0 %v513
    %516 = vmatprep.subr.mxu0 0.0
    %517 = vmatpush1.msra.mxu0 %v512
    %518 = vmatprep.subr.mxu0 0.0
    %519 = vmatpush1.msra.mxu0 %v511
    %520 = vmatprep.subr.mxu0 0.0
    %521 = vmatpush1.msra.mxu0 %v510
    %522 = vmatprep.subr.mxu0 0.0
    %523 = vmatpush1.msra.mxu0 %v509
    %524 = vmatprep.subr.mxu0 0.0
    %525 = vmatpush1.msra.mxu0 %v508
    %526 = vmatprep.subr.mxu0 0.0
    %527 = vmatpush1.msra.mxu0 %v507
    %528 = vmatprep.subr.mxu0 0.0
    %529 = vmatpush1.msra.mxu0 %v506
    %530 = vmatprep.subr.mxu0 0.0
    %531 = vmatpush1.msra.mxu0 %v505
    %532 = vmatprep.subr.mxu0 0.0
    %533 = vmatpush1.msra.mxu0 %v504
    %534 = vmatprep.subr.mxu0 0.0
    %535 = vmatpush1.msra.mxu0 %v503
    %536 = vmatprep.subr.mxu0 0.0
    %537 = vmatpush1.msra.mxu0 %v502
    %538 = vmatprep.subr.mxu0 0.0
    %539 = vmatpush1.msra.mxu0 %v501
    %540 = vmatprep.subr.mxu0 0.0
    %541 = vmatpush1.msra.mxu0 %v500
    %542 = vmatprep.subr.mxu0 0.0
    %543 = vmatpush1.msra.mxu0 %v499
    %544 = vmatprep.subr.mxu0 0.0
    %545 = vmatpush1.msra.mxu0 %v498
    %546 = vmatprep.subr.mxu0 0.0
    %547 = vmatpush2.msra.mxu0 0.0
    %548 = vmatprep.subr.mxu0 0.0
    %549 = vmatpush2.msra.mxu0 0.0
    %550 = vmatprep.subr.mxu0 0.0
    %551 = vmatpush2.msra.mxu0 0.0
    %552 = vmatprep.subr.mxu0 0.0
    %553 = vmatpush2.msra.mxu0 0.0
    %554 = vmatprep.subr.mxu0 0.0
    %555 = vmatpush2.msra.mxu0 0.0
    %556 = vmatprep.subr.mxu0 0.0
    %557 = vmatpush2.msra.mxu0 0.0
    %558 = vmatprep.subr.mxu0 0.0
    %559 = vmatpush2.msra.mxu0 0.0
    %560 = vmatprep.subr.mxu0 0.0
    %561 = vmatpush2.msra.mxu0 0.0
    %562 = vmatprep.subr.mxu0 0.0
    %563 = vmatpush2.msra.mxu0 0.0
    %564 = vmatprep.subr.mxu0 0.0
    %565 = vmatpush2.msra.mxu0 0.0
    %566 = vmatprep.subr.mxu0 0.0
    %567 = vmatpush2.msra.mxu0 0.0
    %568 = vmatprep.subr.mxu0 0.0
    %569 = vmatpush2.msra.mxu0 0.0
    %570 = vmatprep.subr.mxu0 0.0
    %571 = vmatpush2.msra.mxu0 0.0
    %572 = vmatprep.subr.mxu0 0.0
    %573 = vmatpush2.msra.mxu0 0.0
    %574 = vmatprep.subr.mxu0 0.0
    %575 = vmatpush2.msra.mxu0 0.0
    %576 = vmatprep.subr.mxu0 0.0
    %577 = vmatpush2.msra.mxu0 0.0
    %578 = vmatprep.mubr.f32.mxu0 0.0
    %579 = vmatmul.mubr.f32.gmra.mxu0 %v494
    %v580 = vpop.f32.mrf.mxu0
    %v581 = vadd.f32 0.0, %v580
    %v582 = vpop.f32.mrf.mxu0
    %583 = vdwg.mxu0
    %v584 = vrcp.pop %v497
    %v585 = vmul.f32 %v581, %v584
    %586 = vst [vmem:[#allocation11] sm:$0x3] %v585
    // Predicated region
    $region34: #{tpu_custom_call.1} parent=1 // pred_check
      _
    $region35: #{tpu_custom_call.1} parent=1 // pred_check_branch
      %588 = sbr.rel (0) target = $region37
    $region36: #{tpu_custom_call.1} parent=1 // pred_region
      %s590 = ssub.s32 32, 32
      %591 = vsyncadd [#allocation5], %s590
      %s593 = sshll.u32 [#allocation11], 4
      %s594 = int_to_ptr.vmem [resolvable:$true] %s593
      %596 = dma.vmem_to_hbm [thread:$0]  %s594, 32, %s4, [#allocation5]
    $region37: #{tpu_custom_call.1} parent=1 // pred_fallthru
      _
    // Predicated region
    $region38: #{tpu_custom_call.1} parent=1 // pred_check
      _
    $region39: #{tpu_custom_call.1} parent=1 // pred_check_branch
      %598 = sbr.rel (0) target = $region41
    $region40: #{tpu_custom_call.1} parent=1 // pred_region
      %599 = dma.done [#allocation5], 32
    $region41: #{tpu_custom_call.1} parent=1 // pred_fallthru
      _
    %600 = vsyncpa [#allocation4], 1
    %601 = vsyncpa [#allocation7], 1
    %602 = vsyncpa [#allocation10], 1
    %603 = vsyncpa [#allocation5], 1

</llo_original>
